<compile_context>
chip_gen: v6e
topology: v6e:2x2x1
jax: 0.10.0
libtpu: 0.0.40
codegen_flags: <defaults>
</compile_context>

<pallas_src>
import functools
import math

import numpy as np
import jax
import jax.numpy as jnp
from jax import lax
from jax.experimental import pallas as pl
from jax.experimental.pallas import tpu as pltpu


def _round_up(v, m):
    return (v + m - 1) // m * m


def arc_margin_kernel(x_ref, w_ref, lab_ref, out_ref, loss_ref,
                      m_acc, l_acc, t_acc, *,
                      cos_m, sin_m, th, mm, scale, easy_margin,
                      num_classes, block_c, mask_padded_classes):
    c_idx = pl.program_id(1)
    n_c = pl.num_programs(1)

    @pl.when(c_idx == 0)
    def _():
        m_acc[...] = jnp.full_like(m_acc, -jnp.inf)
        l_acc[...] = jnp.zeros_like(l_acc)
        t_acc[...] = jnp.zeros_like(t_acc)

    # Both operands are pre-normalized bf16 -> cosine straight off the MXU (f32 acc).
    cosine = jnp.dot(x_ref[...], w_ref[...],
                     preferred_element_type=jnp.float32)          # (tb, tc)

    # Locate each row's label column within this C tile.
    base = c_idx * block_c
    classes = lax.broadcasted_iota(jnp.int32, cosine.shape, 1) + base
    label = lab_ref[...]                                          # (tb, 1) int32
    is_label = classes == label                                   # (tb, tc) bool
    in_tile = (label >= base) & (label < base + block_c)          # (tb, 1) bool

    # ArcFace margin only for the label column: per-row (tb,1) work, not full tile.
    cos_t = jnp.sum(jnp.where(is_label, cosine, 0.0), axis=-1, keepdims=True)
    sin_t = jnp.sqrt(jnp.maximum(1.0 - cos_t * cos_t, 0.0))       # clamp -> no NaN
    phi = cos_t * cos_m - sin_t * sin_m
    if easy_margin:
        phi = jnp.where(cos_t > 0.0, phi, cos_t)
    else:
        phi = jnp.where(cos_t > th, phi, cos_t - mm)

    output = jnp.where(is_label, phi, cosine) * scale             # (tb, tc)
    out_ref[...] = output.astype(out_ref.dtype)

    # Online logsumexp over the C grid axis.
    def accumulate(z):
        m_prev = m_acc[...]
        m_new = jnp.maximum(m_prev, jnp.max(z, axis=-1, keepdims=True))
        alpha = jnp.exp(m_prev - m_new)
        l_acc[...] = alpha * l_acc[...] + jnp.sum(jnp.exp(z - m_new),
                                                  axis=-1, keepdims=True)
        m_acc[...] = m_new

    if mask_padded_classes:
        # Only the final C tile can contain padded class indices >= num_classes.
        is_last = c_idx == n_c - 1

        @pl.when(jnp.logical_not(is_last))
        def _():
            accumulate(output)

        @pl.when(is_last)
        def _():
            accumulate(jnp.where(classes < num_classes, output, -jnp.inf))
    else:
        accumulate(output)

    # True-class (margin) logit, accumulated from the per-row value.
    t_acc[...] = t_acc[...] + jnp.where(in_tile, phi * scale, 0.0)

    @pl.when(c_idx == n_c - 1)
    def _():
        # per-sample CE = logsumexp(output) - output[label]
        loss_ref[...] = m_acc[...] + jnp.log(l_acc[...]) - t_acc[...]


def arc_margin_product(x, weight, label, *, scale=30.0, margin=0.5,
                       easy_margin=False, block_b=None, block_c=None,
                       logits_dtype=jnp.float32):
    """ArcMarginProduct forward.

    Returns (scaled logits (B, C), mean cross-entropy loss scalar), matching the
    PyTorch module's forward (ls_eps is unused there).  block_b/block_c=None ->
    generation-aware auto selection from pltpu.get_tpu_info().
    """
    B, D = x.shape
    C, D2 = weight.shape
    assert D == D2
    eps = jnp.float32(1e-12)

    # --- F.normalize in f32 (PyTorch semantics), then bf16 for the MXU streams ---
    x32 = x.astype(jnp.float32)
    x_n = x32 / jnp.maximum(
        jnp.sqrt(jnp.sum(x32 * x32, axis=-1, keepdims=True)), eps)
    w32 = weight.astype(jnp.float32)
    w_n = w32 / jnp.maximum(
        jnp.sqrt(jnp.sum(w32 * w32, axis=-1, keepdims=True)), eps)

    # --- generation-aware tile selection & VMEM budget ---
    try:
        info = pltpu.get_tpu_info()
        vmem_cap = int(getattr(info, "vmem_capacity_bytes", 64 * 1024 * 1024))
    except Exception:
        vmem_cap = 64 * 1024 * 1024            # conservative fallback (v7x per-TC)
    budget = int(vmem_cap * 0.45)              # double-buffered working-set budget

    if block_b is None:
        # Each B tile re-streams all of W from HBM; tb>=~256-512 sits at/above the
        # mem/compute crossover on v5e/v6e/v7x.
        # TODO(synk): on v7x pick tb ~= Bp/2 so the 'parallel' B axis feeds both TCs.
        block_b = 512
    tb = min(block_b, _round_up(B, 16))
    tb = _round_up(tb, 16)                     # bf16 x stream: 16 rows per sublane pair

    out_bytes = jnp.dtype(logits_dtype).itemsize
    if block_c is None:
        # working set ~= 2*tc*D*2 (W bf16 db) + 2*tb*tc*out (logits db) + 2*tb*D*2 (x)
        fixed = 2 * tb * D * 2 + 8 * tb * 4 + (1 << 20)
        per_tc = 4 * D + 2 * tb * out_bytes
        avail = max(0, budget - fixed)
        block_c = max(128, min(4096, (avail // max(per_tc, 1)) // 128 * 128))
    tc = max(128, min(block_c, _round_up(C, 128)))
    tc = tc // 128 * 128
    assert tb % 8 == 0 and tc % 128 == 0

    Bp = _round_up(B, tb)
    Cp = _round_up(C, tc)

    x_bf = x_n.astype(jnp.bfloat16)
    lab_p = label.reshape(-1, 1).astype(jnp.int32)
    if Bp != B:
        x_bf = jnp.pad(x_bf, ((0, Bp - B), (0, 0)))
        lab_p = jnp.pad(lab_p, ((0, Bp - B), (0, 0)))

    # Pre-transposed (D, Cp) weights: MXU sees the natural (tb,D)x(D,tc) contraction,
    # no per-step in-VMEM transpose.  In a real model keep W resident in this layout.
    w_t = w_n.astype(jnp.bfloat16).T
    if Cp != C:
        w_t = jnp.pad(w_t, ((0, 0), (0, Cp - C)))

    kernel = functools.partial(
        arc_margin_kernel,
        cos_m=math.cos(margin), sin_m=math.sin(margin),
        th=math.cos(math.pi - margin), mm=math.sin(math.pi - margin) * margin,
        scale=scale, easy_margin=easy_margin,
        num_classes=C, block_c=tc, mask_padded_classes=(Cp != C),
    )

    grid = (Bp // tb, Cp // tc)

    # Double-buffered inputs/outputs + accumulators (+ compiler headroom).
    est_vmem = (2 * tb * D * 2 + 2 * tc * D * 2 + 2 * tb * 4
                + 2 * tb * tc * out_bytes + 2 * tb * 4 + 3 * tb * 4) + (2 << 20)
    vmem_limit = int(min(int(vmem_cap * 0.75),
                         max(32 * 1024 * 1024, 2 * est_vmem)))

    logits, per_sample_ce = pl.pallas_call(
        kernel,
        out_shape=(jax.ShapeDtypeStruct((Bp, Cp), logits_dtype),
                   jax.ShapeDtypeStruct((Bp, 1), jnp.float32)),
        grid_spec=pltpu.PrefetchScalarGridSpec(
            num_scalar_prefetch=0,
            grid=grid,
            in_specs=[
                pl.BlockSpec((tb, D), lambda b, c: (b, 0)),    # x (normalized bf16)
                pl.BlockSpec((D, tc), lambda b, c: (0, c)),    # W^T (normalized bf16)
                pl.BlockSpec((tb, 1), lambda b, c: (b, 0)),    # label
            ],
            out_specs=[
                pl.BlockSpec((tb, tc), lambda b, c: (b, c)),   # scaled logits
                pl.BlockSpec((tb, 1), lambda b, c: (b, 0)),    # per-sample CE
            ],
            scratch_shapes=[pltpu.VMEM((tb, 1), jnp.float32),  # running max
                            pltpu.VMEM((tb, 1), jnp.float32),  # running sum(exp)
                            pltpu.VMEM((tb, 1), jnp.float32)]  # true-class logit
        ),
        compiler_params=pltpu.CompilerParams(
            dimension_semantics=("parallel", "arbitrary"),
            vmem_limit_bytes=vmem_limit),
    )(x_bf, w_t, lab_p)

    logits = logits[:B, :C].astype(jnp.float32)
    loss = jnp.mean(per_sample_ce[:B, 0])   # nn.CrossEntropyLoss reduction='mean'
    return logits, loss


def xavier_uniform(key, out_features, in_features):
    bound = math.sqrt(6.0 / (in_features + out_features))
    return jax.random.uniform(key, (out_features, in_features),
                              dtype=jnp.float32, minval=-bound, maxval=bound)


def _reference(x, weight, label, scale, margin, easy_margin):
    """Plain-JAX reference mirroring the kernel numerics (normalize in f32, bf16 MXU operands)."""
    cos_m, sin_m = math.cos(margin), math.sin(margin)
    th = math.cos(math.pi - margin)
    mm = math.sin(math.pi - margin) * margin
    eps = jnp.float32(1e-12)
    x32 = x.astype(jnp.float32)
    w32 = weight.astype(jnp.float32)
    x_n = x32 / jnp.maximum(jnp.sqrt(jnp.sum(x32 * x32, -1, keepdims=True)), eps)
    w_n = w32 / jnp.maximum(jnp.sqrt(jnp.sum(w32 * w32, -1, keepdims=True)), eps)
    xb = x_n.astype(jnp.bfloat16).astype(jnp.float32)
    wb = w_n.astype(jnp.bfloat16).astype(jnp.float32)
    cosine = jnp.dot(xb, wb.T, preferred_element_type=jnp.float32)
    sine = jnp.sqrt(jnp.maximum(1.0 - cosine * cosine, 0.0))
    phi = cosine * cos_m - sine * sin_m
    phi = (jnp.where(cosine > 0.0, phi, cosine) if easy_margin
           else jnp.where(cosine > th, phi, cosine - mm))
    one_hot = jax.nn.one_hot(label, weight.shape[0], dtype=jnp.float32)
    out = jnp.where(one_hot > 0.5, phi, cosine) * scale
    lse = jax.scipy.special.logsumexp(out, axis=-1)
    true_logit = jnp.sum(one_hot * out, axis=-1)
    return out, jnp.mean(lse - true_logit)


if __name__ == "__main__":
    root = jax.random.PRNGKey(0)
    k_x, k_w, k_lab = jax.random.split(root, 3)

    # Config 1: multi-tile grid (2 B-tiles x 2 C-tiles), no padding.
    B, D, C = 32, 64, 256
    x = jax.random.normal(k_x, (B, D), dtype=jnp.float32)
    weight = xavier_uniform(k_w, C, D)
    label = jax.random.randint(k_lab, (B,), 0, C, dtype=jnp.int32)

    logits, loss = arc_margin_product(x, weight, label, scale=30.0, margin=0.5,
                                      easy_margin=False, block_b=16, block_c=128)
    jax.block_until_ready((logits, loss))
    assert logits.shape == (B, C) and loss.shape == ()
    ref_logits, ref_loss = _reference(x, weight, label, 30.0, 0.5, False)
    np.testing.assert_allclose(np.asarray(logits), np.asarray(ref_logits),
                               rtol=2e-2, atol=2e-2)
    np.testing.assert_allclose(float(loss), float(ref_loss), rtol=2e-2, atol=2e-2)

    # Config 2: ragged B and C (padding on both axes + padded-class masking on the
    # last C tile only).
    B2, C2 = 10, 200
    x2 = x[:B2]
    w2 = weight[:C2]
    lab2 = jnp.clip(label[:B2], 0, C2 - 1)
    logits2, loss2 = arc_margin_product(x2, w2, lab2, scale=30.0, margin=0.5,
                                        easy_margin=False, block_b=16, block_c=128)
    jax.block_until_ready((logits2, loss2))
    assert logits2.shape == (B2, C2) and loss2.shape == ()
    ref_logits2, ref_loss2 = _reference(x2, w2, lab2, 30.0, 0.5, False)
    np.testing.assert_allclose(np.asarray(logits2), np.asarray(ref_logits2),
                               rtol=2e-2, atol=2e-2)
    np.testing.assert_allclose(float(loss2), float(ref_loss2), rtol=2e-2, atol=2e-2)

    # Config 3: auto (generation-aware) tile selection + easy_margin branch.
    logits3, loss3 = arc_margin_product(x, weight, label, scale=30.0, margin=0.5,
                                        easy_margin=True)
    jax.block_until_ready((logits3, loss3))
    assert logits3.shape == (B, C) and loss3.shape == ()
    ref_logits3, ref_loss3 = _reference(x, weight, label, 30.0, 0.5, True)
    np.testing.assert_allclose(np.asarray(logits3), np.asarray(ref_logits3),
                               rtol=2e-2, atol=2e-2)
    np.testing.assert_allclose(float(loss3), float(ref_loss3), rtol=2e-2, atol=2e-2)

    print("KERNEL_OK")
</pallas_src>

<mosaic_0001>
module attributes {stable_mosaic.version = 11 : i64} {
  func.func @arc_margin_kernel(%arg0: i32, %arg1: i32, %arg2: memref<16x64xbf16, #tpu.memory_space<vmem>>, %arg3: memref<64x128xbf16, #tpu.memory_space<vmem>>, %arg4: memref<16x1xi32, #tpu.memory_space<vmem>>, %arg5: memref<16x128xf32, #tpu.memory_space<vmem>>, %arg6: memref<16x1xf32, #tpu.memory_space<vmem>>, %arg7: memref<16x1xf32, #tpu.memory_space<vmem>>, %arg8: memref<16x1xf32, #tpu.memory_space<vmem>>, %arg9: memref<16x1xf32, #tpu.memory_space<vmem>>) attributes {dimension_semantics = [#tpu.dimension_semantics<parallel>, #tpu.dimension_semantics<arbitrary>], iteration_bounds = array<i64: 2, 2>, scalar_prefetch = 0 : i64, scratch_operands = 3 : i64, tpu.core_type = #tpu.core_type<tc>, window_params = [{transform_indices = @transform_0, window_bounds = array<i64: 16, 64>}, {transform_indices = @transform_1, window_bounds = array<i64: 64, 128>}, {transform_indices = @transform_2, window_bounds = array<i64: 16, 1>}, {transform_indices = @transform_3, window_bounds = array<i64: 16, 128>}, {transform_indices = @transform_4, window_bounds = array<i64: 16, 1>}]} {
    %c0_i32 = arith.constant 0 : i32
    %0 = arith.cmpi eq, %arg1, %c0_i32 : i32
    %1 = arith.extui %0 : i1 to i32
    %c0_i32_0 = arith.constant 0 : i32
    %2 = arith.cmpi ne, %1, %c0_i32_0 : i32
    scf.if %2 {
      %cst_35 = arith.constant 0xFF800000 : f32
      %71 = vector.broadcast %cst_35 : f32 to vector<16x1xf32>
      %c0_36 = arith.constant 0 : index
      %c0_37 = arith.constant 0 : index
      %72 = vector.load %arg7[%c0_36, %c0_37] : memref<16x1xf32, #tpu.memory_space<vmem>>, vector<16x1xf32>
      tpu.vector_store %arg7[%c0_36, %c0_37], %71 {strides = array<i32>} : memref<16x1xf32, #tpu.memory_space<vmem>>, vector<16x1xf32>,
      %cst_38 = arith.constant 0.000000e+00 : f32
      %73 = vector.broadcast %cst_38 : f32 to vector<16x1xf32>
      %c0_39 = arith.constant 0 : index
      %c0_40 = arith.constant 0 : index
      %74 = vector.load %arg8[%c0_39, %c0_40] : memref<16x1xf32, #tpu.memory_space<vmem>>, vector<16x1xf32>
      tpu.vector_store %arg8[%c0_39, %c0_40], %73 {strides = array<i32>} : memref<16x1xf32, #tpu.memory_space<vmem>>, vector<16x1xf32>,
      %cst_41 = arith.constant 0.000000e+00 : f32
      %75 = vector.broadcast %cst_41 : f32 to vector<16x1xf32>
      %c0_42 = arith.constant 0 : index
      %c0_43 = arith.constant 0 : index
      %76 = vector.load %arg9[%c0_42, %c0_43] : memref<16x1xf32, #tpu.memory_space<vmem>>, vector<16x1xf32>
      tpu.vector_store %arg9[%c0_42, %c0_43], %75 {strides = array<i32>} : memref<16x1xf32, #tpu.memory_space<vmem>>, vector<16x1xf32>,
    } else {
    }
    %c0 = arith.constant 0 : index
    %c0_1 = arith.constant 0 : index
    %3 = vector.load %arg2[%c0, %c0_1] : memref<16x64xbf16, #tpu.memory_space<vmem>>, vector<16x64xbf16>
    %c0_2 = arith.constant 0 : index
    %c0_3 = arith.constant 0 : index
    %4 = vector.load %arg3[%c0_2, %c0_3] : memref<64x128xbf16, #tpu.memory_space<vmem>>, vector<64x128xbf16>
    %cst = arith.constant dense<0.000000e+00> : vector<16x128xf32>
    %5 = tpu.matmul %3, %4, %cst {dimension_numbers = #tpu.dot_dimension_numbers<[1], [0], [0], [1], [0, 0, 1, 1], [], []>} : vector<16x64xbf16>, vector<64x128xbf16>, vector<16x128xf32> -> vector<16x128xf32>
    %c128_i32 = arith.constant 128 : i32
    %6 = arith.muli %arg1, %c128_i32 : i32
    %7 = tpu.iota {dimensions = array<i32: 1>} : vector<16x128xi32>
    %8 = vector.broadcast %6 : i32 to vector<16x128xi32>
    %9 = arith.addi %7, %8 : vector<16x128xi32>
    %c0_4 = arith.constant 0 : index
    %c0_5 = arith.constant 0 : index
    %10 = vector.load %arg4[%c0_4, %c0_5] : memref<16x1xi32, #tpu.memory_space<vmem>>, vector<16x1xi32>
    %11 = vector.broadcast %10 : vector<16x1xi32> to vector<16x128xi32>
    %12 = arith.cmpi eq, %9, %11 : vector<16x128xi32>
    %13 = vector.broadcast %6 : i32 to vector<16x1xi32>
    %14 = arith.cmpi sge, %10, %13 : vector<16x1xi32>
    %c128_i32_6 = arith.constant 128 : i32
    %15 = arith.addi %6, %c128_i32_6 : i32
    %16 = vector.broadcast %15 : i32 to vector<16x1xi32>
    %17 = arith.cmpi slt, %10, %16 : vector<16x1xi32>
    %18 = arith.andi %14, %17 : vector<16x1xi1>
    %cst_7 = arith.constant 0.000000e+00 : f32
    %19 = vector.broadcast %cst_7 : f32 to vector<16x128xf32>
    %20 = arith.select %12, %5, %19 : vector<16x128xi1>, vector<16x128xf32>
    %cst_8 = arith.constant dense<0.000000e+00> : vector<16xf32>
    %21 = vector.multi_reduction <add>, %20, %cst_8 [1] : vector<16x128xf32> to vector<16xf32>
    %22 = vector.shape_cast %21 : vector<16xf32> to vector<16x1xf32>
    %23 = arith.mulf %22, %22 : vector<16x1xf32>
    %cst_9 = arith.constant 1.000000e+00 : f32
    %24 = vector.broadcast %cst_9 : f32 to vector<16x1xf32>
    %25 = arith.subf %24, %23 : vector<16x1xf32>
    %cst_10 = arith.constant 0.000000e+00 : f32
    %26 = vector.broadcast %cst_10 : f32 to vector<16x1xf32>
    %27 = arith.maximumf %25, %26 : vector<16x1xf32>
    %28 = math.sqrt %27 : vector<16x1xf32>
    %cst_11 = arith.constant 0.87758255 : f32
    %29 = vector.broadcast %cst_11 : f32 to vector<16x1xf32>
    %30 = arith.mulf %22, %29 : vector<16x1xf32>
    %cst_12 = arith.constant 0.47942555 : f32
    %31 = vector.broadcast %cst_12 : f32 to vector<16x1xf32>
    %32 = arith.mulf %28, %31 : vector<16x1xf32>
    %33 = arith.subf %30, %32 : vector<16x1xf32>
    %cst_13 = arith.constant -0.87758255 : f32
    %34 = vector.broadcast %cst_13 : f32 to vector<16x1xf32>
    %35 = arith.cmpf ogt, %22, %34 : vector<16x1xf32>
    %cst_14 = arith.constant 0.239712775 : f32
    %36 = vector.broadcast %cst_14 : f32 to vector<16x1xf32>
    %37 = arith.subf %22, %36 : vector<16x1xf32>
    %38 = arith.select %35, %33, %37 : vector<16x1xi1>, vector<16x1xf32>
    %39 = vector.shape_cast %38 : vector<16x1xf32> to vector<16x1xf32>
    %40 = vector.broadcast %39 : vector<16x1xf32> to vector<16x128xf32>
    %41 = arith.select %12, %40, %5 : vector<16x128xi1>, vector<16x128xf32>
    %cst_15 = arith.constant 3.000000e+01 : f32
    %42 = vector.broadcast %cst_15 : f32 to vector<16x128xf32>
    %43 = arith.mulf %41, %42 : vector<16x128xf32>
    %c0_16 = arith.constant 0 : index
    %c0_17 = arith.constant 0 : index
    %44 = vector.load %arg5[%c0_16, %c0_17] : memref<16x128xf32, #tpu.memory_space<vmem>>, vector<16x128xf32>
    tpu.vector_store %arg5[%c0_16, %c0_17], %43 {strides = array<i32>} : memref<16x128xf32, #tpu.memory_space<vmem>>, vector<16x128xf32>,
    %c0_18 = arith.constant 0 : index
    %c0_19 = arith.constant 0 : index
    %45 = vector.load %arg7[%c0_18, %c0_19] : memref<16x1xf32, #tpu.memory_space<vmem>>, vector<16x1xf32>
    %cst_20 = arith.constant dense<0xFF800000> : vector<16xf32>
    %46 = vector.multi_reduction <maximumf>, %43, %cst_20 [1] : vector<16x128xf32> to vector<16xf32>
    %47 = vector.shape_cast %46 : vector<16xf32> to vector<16x1xf32>
    %48 = arith.maximumf %45, %47 : vector<16x1xf32>
    %49 = arith.subf %45, %48 : vector<16x1xf32>
    %50 = math.exp %49 : vector<16x1xf32>
    %c0_21 = arith.constant 0 : index
    %c0_22 = arith.constant 0 : index
    %51 = vector.load %arg8[%c0_21, %c0_22] : memref<16x1xf32, #tpu.memory_space<vmem>>, vector<16x1xf32>
    %52 = arith.mulf %50, %51 : vector<16x1xf32>
    %53 = vector.broadcast %48 : vector<16x1xf32> to vector<16x128xf32>
    %54 = arith.subf %43, %53 : vector<16x128xf32>
    %55 = math.exp %54 : vector<16x128xf32>
    %cst_23 = arith.constant dense<0.000000e+00> : vector<16xf32>
    %56 = vector.multi_reduction <add>, %55, %cst_23 [1] : vector<16x128xf32> to vector<16xf32>
    %57 = vector.shape_cast %56 : vector<16xf32> to vector<16x1xf32>
    %58 = arith.addf %52, %57 : vector<16x1xf32>
    %c0_24 = arith.constant 0 : index
    %c0_25 = arith.constant 0 : index
    %59 = vector.load %arg8[%c0_24, %c0_25] : memref<16x1xf32, #tpu.memory_space<vmem>>, vector<16x1xf32>
    tpu.vector_store %arg8[%c0_24, %c0_25], %58 {strides = array<i32>} : memref<16x1xf32, #tpu.memory_space<vmem>>, vector<16x1xf32>,
    %c0_26 = arith.constant 0 : index
    %c0_27 = arith.constant 0 : index
    %60 = vector.load %arg7[%c0_26, %c0_27] : memref<16x1xf32, #tpu.memory_space<vmem>>, vector<16x1xf32>
    tpu.vector_store %arg7[%c0_26, %c0_27], %48 {strides = array<i32>} : memref<16x1xf32, #tpu.memory_space<vmem>>, vector<16x1xf32>,
    %c0_28 = arith.constant 0 : index
    %c0_29 = arith.constant 0 : index
    %61 = vector.load %arg9[%c0_28, %c0_29] : memref<16x1xf32, #tpu.memory_space<vmem>>, vector<16x1xf32>
    %cst_30 = arith.constant 3.000000e+01 : f32
    %62 = vector.broadcast %cst_30 : f32 to vector<16x1xf32>
    %63 = arith.mulf %38, %62 : vector<16x1xf32>
    %cst_31 = arith.constant 0.000000e+00 : f32
    %64 = vector.broadcast %cst_31 : f32 to vector<16x1xf32>
    %65 = arith.select %18, %63, %64 : vector<16x1xi1>, vector<16x1xf32>
    %66 = arith.addf %61, %65 : vector<16x1xf32>
    %c0_32 = arith.constant 0 : index
    %c0_33 = arith.constant 0 : index
    %67 = vector.load %arg9[%c0_32, %c0_33] : memref<16x1xf32, #tpu.memory_space<vmem>>, vector<16x1xf32>
    tpu.vector_store %arg9[%c0_32, %c0_33], %66 {strides = array<i32>} : memref<16x1xf32, #tpu.memory_space<vmem>>, vector<16x1xf32>,
    %c1_i32 = arith.constant 1 : i32
    %68 = arith.cmpi eq, %arg1, %c1_i32 : i32
    %69 = arith.extui %68 : i1 to i32
    %c0_i32_34 = arith.constant 0 : i32
    %70 = arith.cmpi ne, %69, %c0_i32_34 : i32
    scf.if %70 {
      %c0_35 = arith.constant 0 : index
      %c0_36 = arith.constant 0 : index
      %71 = vector.load %arg7[%c0_35, %c0_36] : memref<16x1xf32, #tpu.memory_space<vmem>>, vector<16x1xf32>
      %c0_37 = arith.constant 0 : index
      %c0_38 = arith.constant 0 : index
      %72 = vector.load %arg8[%c0_37, %c0_38] : memref<16x1xf32, #tpu.memory_space<vmem>>, vector<16x1xf32>
      %73 = math.log %72 : vector<16x1xf32>
      %74 = arith.addf %71, %73 : vector<16x1xf32>
      %c0_39 = arith.constant 0 : index
      %c0_40 = arith.constant 0 : index
      %75 = vector.load %arg9[%c0_39, %c0_40] : memref<16x1xf32, #tpu.memory_space<vmem>>, vector<16x1xf32>
      %76 = arith.subf %74, %75 : vector<16x1xf32>
      %c0_41 = arith.constant 0 : index
      %c0_42 = arith.constant 0 : index
      %77 = vector.load %arg6[%c0_41, %c0_42] : memref<16x1xf32, #tpu.memory_space<vmem>>, vector<16x1xf32>
      tpu.vector_store %arg6[%c0_41, %c0_42], %76 {strides = array<i32>} : memref<16x1xf32, #tpu.memory_space<vmem>>, vector<16x1xf32>,
    } else {
    }
    return
  }
  func.func @transform_0(%arg0: i32, %arg1: i32) -> (i32, i32) {
    %c0_i32 = arith.constant 0 : i32
    %c0_i32_0 = arith.constant 0 : i32
    return %arg0, %c0_i32 : i32, i32
  }
  func.func @transform_1(%arg0: i32, %arg1: i32) -> (i32, i32) {
    %c0_i32 = arith.constant 0 : i32
    %c0_i32_0 = arith.constant 0 : i32
    return %c0_i32, %arg1 : i32, i32
  }
  func.func @transform_2(%arg0: i32, %arg1: i32) -> (i32, i32) {
    %c0_i32 = arith.constant 0 : i32
    %c0_i32_0 = arith.constant 0 : i32
    return %arg0, %c0_i32 : i32, i32
  }
  func.func @transform_3(%arg0: i32, %arg1: i32) -> (i32, i32) {
    %c0_i32 = arith.constant 0 : i32
    return %arg0, %arg1 : i32, i32
  }
  func.func @transform_4(%arg0: i32, %arg1: i32) -> (i32, i32) {
    %c0_i32 = arith.constant 0 : i32
    %c0_i32_0 = arith.constant 0 : i32
    return %arg0, %c0_i32 : i32, i32
  }
}

</mosaic_0001>

<llo_original>
// kernel: tpu_custom_call.1
$region0: #{tpu_custom_call.1}
  #allocation0 [shape = 'u32[]', space=smem, size = 0x4, offset = 0x4, fixed_abs, tag = 'smem constant byte address 0x4 - core index']
  #allocation1 [shape = 'u32[144,128]{1,0:T(1,128)}', space=vmem, size = 0x12000, scoped, tag = 'internal scratch']
  #allocation2 [shape = 'f32[16,1]{1,0:T(8,128)}', space=vmem, size = 0x2000, scoped, tag = 'scratch operand']
  #allocation3 [shape = 'f32[16,1]{1,0:T(8,128)}', space=vmem, size = 0x2000, scoped, tag = 'scratch operand']
  #allocation4 [shape = 'f32[16,1]{1,0:T(8,128)}', space=vmem, size = 0x2000, scoped, tag = 'scratch operand']
  %s0 = inlined_call_operand.vmem [shape: bf16[32,64], index: 0, kind: input, shape index: {}]
  %s1 = inlined_call_operand.hbm [shape: bf16[64,256], index: 1, kind: input, shape index: {}]
  %s2 = inlined_call_operand.vmem [shape: s32[32,1], index: 2, kind: input, shape index: {}]
  %s3 = inlined_call_operand.hbm [shape: f32[32,256], index: 3, kind: output, shape index: {0}]
  %s4 = inlined_call_operand.vmem [shape: f32[32,1], index: 4, kind: output, shape index: {1}]
  %5 = xla_tuple %s3, %s4
  %s6 = sld [smem:[#allocation0]]
  $region65: #{tpu_custom_call.1} parent=0
    _
  %s8 = ssub.s32 1, %s6
  %s9 = scalar_select 0, %s8, %s6
  $region1: #{tpu_custom_call.1} parent=0
    #allocation5 [shape = 'u8[32768]{0}', space=vmem, size = 0x8000, scoped, tag = 'input window, operand 1']
    #allocation6 [shape = 's32[2]{0}', space=sflag, size = 0x8, scoped, tag = 'scoped memory for tpu_custom_call.1']
    #allocation7 [shape = 's32[2]{0}', space=sflag, size = 0x8, scoped, tag = 'scoped memory for tpu_custom_call.1']
    #allocation8 [shape = 'u8[16384]{0}', space=vmem, size = 0x4000, scoped, tag = 'output window, operand 0']
    %10 = vsyncpa [#allocation6], 0
    %s11 = scalar_lea.sflag [#allocation6], 1
    %12 = vsyncpa %s11, 0
    %13 = vsyncpa [#allocation7], 0
    %s14 = scalar_lea.sflag [#allocation7], 1
    %15 = vsyncpa %s14, 0
    loop: start=0, step=1, limit=6
    $region2: #{tpu_custom_call.1} parent=1 // loop_pre_header
      _
    $region3: #{tpu_custom_call.1} parent=1 // loop_header
      %s17 = sphi 0, %s21
      %p18 = scmp.ge.s32.totalorder %s17, 6
      %s24 = sphi 0, %s36
      %s25 = sphi 0, %s32
      %s26 = sphi 0, %s24
      %s27 = sphi 0, %s25
      %s28 = sphi 0, %s26
      %s29 = sphi 0, %s27
      %s39 = sphi 0, %s41
      %s42 = sphi 0, %s39
      %s43 = sphi 0, %s42
      %s59 = sphi 0, %s43
      %s65 = sphi 0, %s67
      %s68 = sphi 0, %s65
      %s69 = sphi 0, %s68
      %s85 = sphi 0, %s69
      %s91 = sphi 0, %s93
      %s94 = sphi 0, %s91
      %s95 = sphi 0, %s94
      %s111 = sphi 0, %s95
      %s119 = sphi 0, %s121
      %s122 = sphi 0, %s119
      %s123 = sphi 0, %s122
      %s139 = sphi 0, %s123
      %s145 = sphi 0, %s147
      %s148 = sphi 0, %s145
      %s149 = sphi 0, %s148
      %s165 = sphi 0, %s149
    $region4: #{tpu_custom_call.1} parent=1 // loop_header_branch
      %20 = sbr.rel (%p18) target = $region8
    $region5: #{tpu_custom_call.1} parent=1 // loop_body
      %s22 = ssub.s32 %s17, 1
      %s23 = ssub.s32 %s17, 2
      %s30 = sadd.s32 1, %s25
      %p31 = scmp.ge.s32.totalorder %s30, 2
      %s32 = scalar_select %p31, 0, %s30
      %s33 = sadd.s32 1, %s24
      %s34 = scalar_select %p31, %s33, %s24
      %p35 = scmp.ge.s32.totalorder %s34, 2
      %s36 = scalar_select %p35, 0, %s34
      %s37 = ssub.s32 %s24, %s36
      %p38 = scmp.eq.s32.totalorder %s37, 0
      %s40 = sadd.s32 %s39, 1
      %s41 = scalar_select %p38, %s39, %s40
      %p44 = pneg %p38
      %p45 = scmp.eq.s32.totalorder %s17, 3
      %p46 = por %p44, %p45
      %p47 = scmp.ne.s32.totalorder %s39, %s42
      %p48 = scmp.eq.s32.totalorder %s17, 0
      %p49 = por %p47, %p48
      %p50 = scmp.ne.s32.totalorder %s39, %s42
      %p51 = scmp.eq.s32.totalorder %s22, 3
      %p52 = por %p50, %p51
      %p53 = scmp.ne.s32.totalorder %s42, %s43
      %p54 = scmp.eq.s32.totalorder %s22, 0
      %p55 = por %p53, %p54
      %p56 = scmp.ne.s32.totalorder %s42, %s43
      %p57 = scmp.eq.s32.totalorder %s23, 3
      %p58 = por %p56, %p57
      %p60 = scmp.ne.s32.totalorder %s43, %s59
      %p61 = scmp.eq.s32.totalorder %s23, 0
      %p62 = por %p60, %p61
      %s63 = ssub.s32 %s25, %s32
      %p64 = scmp.eq.s32.totalorder %s63, 0
      %s66 = sadd.s32 %s65, 1
      %s67 = scalar_select %p64, %s65, %s66
      %p70 = pneg %p64
      %p71 = scmp.eq.s32.totalorder %s17, 3
      %p72 = por %p70, %p71
      %p73 = scmp.ne.s32.totalorder %s65, %s68
      %p74 = scmp.eq.s32.totalorder %s17, 0
      %p75 = por %p73, %p74
      %p76 = scmp.ne.s32.totalorder %s65, %s68
      %p77 = scmp.eq.s32.totalorder %s22, 3
      %p78 = por %p76, %p77
      %p79 = scmp.ne.s32.totalorder %s68, %s69
      %p80 = scmp.eq.s32.totalorder %s22, 0
      %p81 = por %p79, %p80
      %p82 = scmp.ne.s32.totalorder %s68, %s69
      %p83 = scmp.eq.s32.totalorder %s23, 3
      %p84 = por %p82, %p83
      %p86 = scmp.ne.s32.totalorder %s69, %s85
      %p87 = scmp.eq.s32.totalorder %s23, 0
      %p88 = por %p86, %p87
      %s89 = ssub.s32 %s24, %s36
      %p90 = scmp.eq.s32.totalorder %s89, 0
      %s92 = sadd.s32 %s91, 1
      %s93 = scalar_select %p90, %s91, %s92
      %p96 = pneg %p90
      %p97 = scmp.eq.s32.totalorder %s17, 3
      %p98 = por %p96, %p97
      %p99 = scmp.ne.s32.totalorder %s91, %s94
      %p100 = scmp.eq.s32.totalorder %s17, 0
      %p101 = por %p99, %p100
      %p102 = scmp.ne.s32.totalorder %s91, %s94
      %p103 = scmp.eq.s32.totalorder %s22, 3
      %p104 = por %p102, %p103
      %p105 = scmp.ne.s32.totalorder %s94, %s95
      %p106 = scmp.eq.s32.totalorder %s22, 0
      %p107 = por %p105, %p106
      %p108 = scmp.ne.s32.totalorder %s94, %s95
      %p109 = scmp.eq.s32.totalorder %s23, 3
      %p110 = por %p108, %p109
      %p112 = scmp.ne.s32.totalorder %s95, %s111
      %p113 = scmp.eq.s32.totalorder %s23, 0
      %p114 = por %p112, %p113
      %s115 = ssub.s32 %s24, %s36
      %s116 = ssub.s32 %s25, %s32
      %s117 = sor.u32 %s115, %s116
      %p118 = scmp.eq.s32.totalorder %s117, 0
      %s120 = sadd.s32 %s119, 1
      %s121 = scalar_select %p118, %s119, %s120
      %p124 = pneg %p118
      %p125 = scmp.eq.s32.totalorder %s17, 3
      %p126 = por %p124, %p125
      %p127 = scmp.ne.s32.totalorder %s119, %s122
      %p128 = scmp.eq.s32.totalorder %s17, 0
      %p129 = por %p127, %p128
      %p130 = scmp.ne.s32.totalorder %s119, %s122
      %p131 = scmp.eq.s32.totalorder %s22, 3
      %p132 = por %p130, %p131
      %p133 = scmp.ne.s32.totalorder %s122, %s123
      %p134 = scmp.eq.s32.totalorder %s22, 0
      %p135 = por %p133, %p134
      %p136 = scmp.ne.s32.totalorder %s122, %s123
      %p137 = scmp.eq.s32.totalorder %s23, 3
      %p138 = por %p136, %p137
      %p140 = scmp.ne.s32.totalorder %s123, %s139
      %p141 = scmp.eq.s32.totalorder %s23, 0
      %p142 = por %p140, %p141
      %s143 = ssub.s32 %s24, %s36
      %p144 = scmp.eq.s32.totalorder %s143, 0
      %s146 = sadd.s32 %s145, 1
      %s147 = scalar_select %p144, %s145, %s146
      %p150 = pneg %p144
      %p151 = scmp.eq.s32.totalorder %s17, 3
      %p152 = por %p150, %p151
      %p153 = scmp.ne.s32.totalorder %s145, %s148
      %p154 = scmp.eq.s32.totalorder %s17, 0
      %p155 = por %p153, %p154
      %p156 = scmp.ne.s32.totalorder %s145, %s148
      %p157 = scmp.eq.s32.totalorder %s22, 3
      %p158 = por %p156, %p157
      %p159 = scmp.ne.s32.totalorder %s148, %s149
      %p160 = scmp.eq.s32.totalorder %s22, 0
      %p161 = por %p159, %p160
      %p162 = scmp.ne.s32.totalorder %s148, %s149
      %p163 = scmp.eq.s32.totalorder %s23, 3
      %p164 = por %p162, %p163
      %p166 = scmp.ne.s32.totalorder %s149, %s165
      %p167 = scmp.eq.s32.totalorder %s23, 0
      %p168 = por %p166, %p167
      %p169 = scmp.le.s32.totalorder 1, %s17
      %p170 = scmp.lt.s32.totalorder %s17, 5
      %p171 = pnand %p169, %p170
      %p172 = pneg %p171
      // Predicated region
      $region9: #{tpu_custom_call.1} parent=5 // pred_check
        _
      $region10: #{tpu_custom_call.1} parent=5 // pred_check_branch
        %174 = sbr.rel (%p171) target = $region12
      $region11: #{tpu_custom_call.1} parent=5 // pred_region
        %s175 = ssub.s32 %s17, 1
      $region12: #{tpu_custom_call.1} parent=5 // pred_fallthru
        _
      %p176 = scmp.lt.s32.totalorder %s17, 4
      // Predicated region
      $region13: #{tpu_custom_call.1} parent=5 // pred_check
        %p177 = pneg %p176
      $region14: #{tpu_custom_call.1} parent=5 // pred_check_branch
        %179 = sbr.rel (%p177) target = $region16
      $region15: #{tpu_custom_call.1} parent=5 // pred_region
        // Predicated region
        $region17: #{tpu_custom_call.1} parent=15 // pred_check
          %p180 = pneg %p49
        $region18: #{tpu_custom_call.1} parent=15 // pred_check_branch
          %182 = sbr.rel (%p180) target = $region20
        $region19: #{tpu_custom_call.1} parent=15 // pred_region
          %s183 = smul.u32 2, %s24
          %p184 = scmp.lt.s32.totalorder %s183, 3
          %s185 = scalar_select %p184, %s183, 3
          %s186 = smul.addr %s185, 4
          %s187 = scalar_lea.vmem %s0, %s186
          %s188 = smul.u32 2, %s24
        $region20: #{tpu_custom_call.1} parent=15 // pred_fallthru
          _
        // Predicated region
        $region21: #{tpu_custom_call.1} parent=15 // pred_check
          %p189 = pneg %p75
        $region22: #{tpu_custom_call.1} parent=15 // pred_check_branch
          %191 = sbr.rel (%p189) target = $region24
        $region23: #{tpu_custom_call.1} parent=15 // pred_region
          %s192 = sand.u32 %s65, 1
          %s193 = scalar_lea.sflag [#allocation6], %s192
          %s194 = sand.u32 %s65, 1
          %s195 = smul.addr %s194, 32
          %s196 = scalar_lea.vmem [#allocation5], %s195
          %s198 = ssub.s32 512, 512
          %199 = vsyncadd %s193, %s198
          %s200 = smul.addr %s25, 64
          %s201 = scalar_lea.hbm %s1, %s200
          %s202 = sshll.u32 %s196, 4
          %s203 = int_to_ptr.vmem [resolvable:$true] %s202
          %208 = dma.hbm_to_vmem [thread:$0]  %s201, 512, %s203, %s193, 128, 64, 4
        $region24: #{tpu_custom_call.1} parent=15 // pred_fallthru
          _
        // Predicated region
        $region25: #{tpu_custom_call.1} parent=15 // pred_check
          %p209 = pneg %p101
        $region26: #{tpu_custom_call.1} parent=15 // pred_check_branch
          %211 = sbr.rel (%p209) target = $region28
        $region27: #{tpu_custom_call.1} parent=15 // pred_region
          %s212 = smul.u32 2, %s24
          %p213 = scmp.lt.s32.totalorder %s212, 3
          %s214 = scalar_select %p213, %s212, 3
          %s215 = smul.addr %s214, 8
          %s216 = scalar_lea.vmem %s2, %s215
          %s217 = smul.u32 2, %s24
        $region28: #{tpu_custom_call.1} parent=15 // pred_fallthru
          _
      $region16: #{tpu_custom_call.1} parent=5 // pred_fallthru
        _
      %p218 = scmp.le.s32.totalorder 1, %s17
      %p219 = scmp.lt.s32.totalorder %s17, 5
      %p220 = pnand %p218, %p219
      %p221 = pneg %p220
      // Predicated region
      $region29: #{tpu_custom_call.1} parent=5 // pred_check
        _
      $region30: #{tpu_custom_call.1} parent=5 // pred_check_branch
        %223 = sbr.rel (%p220) target = $region32
      $region31: #{tpu_custom_call.1} parent=5 // pred_region
        %s224 = ssub.s32 %s17, 1
        %s225 = sand.u32 %s68, 1
        %s226 = scalar_lea.sflag [#allocation6], %s225
        %s227 = sand.u32 %s68, 1
        %s228 = smul.addr %s227, 32
        %s229 = scalar_lea.vmem [#allocation5], %s228
        // Predicated region
        $region33: #{tpu_custom_call.1} parent=31 // pred_check
          %p230 = pneg %p81
        $region34: #{tpu_custom_call.1} parent=31 // pred_check_branch
          %232 = sbr.rel (%p230) target = $region36
        $region35: #{tpu_custom_call.1} parent=31 // pred_region
          %233 = dma.done %s226, 512
        $region36: #{tpu_custom_call.1} parent=31 // pred_fallthru
          _
        %s234 = smul.u32 2, %s26
        %p235 = scmp.lt.s32.totalorder %s234, 3
        %s236 = scalar_select %p235, %s234, 3
        %s237 = smul.addr %s236, 4
        %s238 = scalar_lea.vmem %s0, %s237
        %p239 = pneg %p55
        %p240 = pneg %p52
        %s241 = sand.u32 %s68, 1
        %s242 = scalar_lea.sflag [#allocation6], %s241
        %s243 = sand.u32 %s68, 1
        %s244 = smul.addr %s243, 32
        %s245 = scalar_lea.vmem [#allocation5], %s244
        %p246 = pneg %p81
        %p247 = pneg %p78
        %s248 = smul.u32 2, %s26
        %p249 = scmp.lt.s32.totalorder %s248, 3
        %s250 = scalar_select %p249, %s248, 3
        %s251 = smul.addr %s250, 8
        %s252 = scalar_lea.vmem %s2, %s251
        %p253 = pneg %p107
        %p254 = pneg %p104
        %p255 = pneg %p135
        %p256 = pneg %p132
        %s257 = sand.u32 %s122, 1
        %s258 = scalar_lea.sflag [#allocation7], %s257
        %s259 = sand.u32 %s122, 1
        %s260 = smul.addr %s259, 16
        %s261 = scalar_lea.vmem [#allocation8], %s260
        %p262 = pneg %p161
        %p263 = pneg %p158
        %s264 = smul.u32 2, %s26
        %p265 = scmp.lt.s32.totalorder %s264, 3
        %s266 = scalar_select %p265, %s264, 3
        %s267 = smul.addr %s266, 8
        %s268 = scalar_lea.vmem %s4, %s267
        %s269 = smul.u32 2, %s26
        %p270 = scmp.lt.s32.totalorder %s269, 3
        %s271 = scalar_select %p270, %s269, 3
        %s272 = smul.addr %s271, 4
        %s273 = scalar_lea.vmem %s0, %s272
        %s274 = smul.u32 2, %s26
        %s275 = smul.u32 2, %s26
        %p276 = scmp.lt.s32.totalorder %s275, 3
        %s277 = scalar_select %p276, %s275, 3
        %s278 = smul.addr %s277, 8
        %s279 = scalar_lea.vmem %s2, %s278
        %s280 = smul.u32 2, %s26
        %s281 = smul.u32 2, %s26
        %s282 = smul.u32 2, %s26
        %p283 = scmp.lt.s32.totalorder %s282, 3
        %s284 = scalar_select %p283, %s282, 3
        %s285 = smul.addr %s284, 8
        %s286 = scalar_lea.vmem %s4, %s285
        %s287 = smul.u32 2, %s26
        %p289 = scmp.eq.s32.totalorder %s27, 0
        // Predicated region
        $region37: #{tpu_custom_call.1} parent=31 // pred_check
          %p290 = pneg %p289
        $region38: #{tpu_custom_call.1} parent=31 // pred_check_branch
          %292 = sbr.rel (%p290) target = $region40
        $region39: #{tpu_custom_call.1} parent=31 // pred_region
          %vm293 = vcmask 7168
          %294 = vst.msk [vmem:[#allocation2] sm:$0xff] %vm293, -inf
          %295 = vst.msk [vmem:[#allocation2 + $0x8] sm:$0xff] %vm293, -inf
          %296 = vst.msk [vmem:[#allocation3] sm:$0xff] %vm293, 0.0
          %297 = vst.msk [vmem:[#allocation3 + $0x8] sm:$0xff] %vm293, 0.0
          %298 = vst.msk [vmem:[#allocation4] sm:$0xff] %vm293, 0.0
          %299 = vst.msk [vmem:[#allocation4 + $0x8] sm:$0xff] %vm293, 0.0
        $region40: #{tpu_custom_call.1} parent=31 // pred_fallthru
          _
        %v300 = vld [vmem:[%s273] sm:$0xf]
        %v301 = vld [vmem:[%s273 + $0x4] sm:$0xf]
        %v302 = vld [vmem:[%s229] sm:$0xf]
        %v303 = vld [vmem:[%s229 + $0x4] sm:$0xf]
        %v304 = vld [vmem:[%s229 + $0x8] sm:$0xf]
        %v305 = vld [vmem:[%s229 + $0xc] sm:$0xf]
        %v306 = vld [vmem:[%s229 + $0x10] sm:$0xf]
        %v307 = vld [vmem:[%s229 + $0x14] sm:$0xf]
        %v308 = vld [vmem:[%s229 + $0x18] sm:$0xf]
        %v309 = vld [vmem:[%s229 + $0x1c] sm:$0xf]
        %v312 = vunpack.c.l.b16 %v300
        %v313 = vunpack.c.l.b16 %v301
        %v314 = vpack.c.b16 %v313, %v312
        %v323 = vunpack.c.l.b16 %v302
        %v324 = vunpack.c.l.b16 %v303
        %v325 = vunpack.c.l.b16 %v304
        %v326 = vunpack.c.l.b16 %v305
        %v327 = vunpack.c.l.b16 %v306
        %v328 = vunpack.c.l.b16 %v307
        %v329 = vunpack.c.l.b16 %v308
        %v330 = vunpack.c.l.b16 %v309
        %v331 = vpack.c.b16 %v324, %v323
        %v332 = vpack.c.b16 %v326, %v325
        %v333 = vpack.c.b16 %v328, %v327
        %v334 = vpack.c.b16 %v330, %v329
        %vm339 = vcmask 523264
        %v341 = vsel %vm339, %v314, 0
        %343 = vmatprep.subr.bf16.mxu0 0
        %344 = vmatpush1.bf16.msra.mxu0 0
        %345 = vmatprep.subr.bf16.mxu0 0
        %346 = vmatpush1.bf16.msra.mxu0 0
        %347 = vmatprep.subr.bf16.mxu0 0
        %348 = vmatpush1.bf16.msra.mxu0 0
        %349 = vmatprep.subr.bf16.mxu0 0
        %350 = vmatpush1.bf16.msra.mxu0 0
        %351 = vmatprep.subr.bf16.mxu0 0
        %352 = vmatpush1.bf16.msra.mxu0 %v334
        %353 = vmatprep.subr.bf16.mxu0 0
        %354 = vmatpush1.bf16.msra.mxu0 %v333
        %355 = vmatprep.subr.bf16.mxu0 0
        %356 = vmatpush1.bf16.msra.mxu0 %v332
        %357 = vmatprep.subr.bf16.mxu0 0
        %358 = vmatpush1.bf16.msra.mxu0 %v331
        %359 = vmatprep.subr.bf16.mxu0 0
        %360 = vmatpush2.bf16.msra.mxu0 0
        %361 = vmatprep.subr.bf16.mxu0 0
        %362 = vmatpush2.bf16.msra.mxu0 0
        %363 = vmatprep.subr.bf16.mxu0 0
        %364 = vmatpush2.bf16.msra.mxu0 0
        %365 = vmatprep.subr.bf16.mxu0 0
        %366 = vmatpush2.bf16.msra.mxu0 0
        %367 = vmatprep.subr.bf16.mxu0 0
        %368 = vmatpush2.bf16.msra.mxu0 0
        %369 = vmatprep.subr.bf16.mxu0 0
        %370 = vmatpush2.bf16.msra.mxu0 0
        %371 = vmatprep.subr.bf16.mxu0 0
        %372 = vmatpush2.bf16.msra.mxu0 0
        %373 = vmatprep.subr.bf16.mxu0 0
        %374 = vmatpush2.bf16.msra.mxu0 0
        %375 = vmatprep.mubr.bf16.mxu0 0
        %376 = vmatmul.mubr.bf16.gmra.mxu0 %v341
        %v377 = vpop.f32.mrf.mxu0
        %v378 = vadd.f32 0.0, %v377
        %v379 = vpop.f32.mrf.mxu0
        %v380 = vpop.f32.mrf.mxu0
        %v381 = vadd.f32 0.0, %v380
        %v382 = vpop.f32.mrf.mxu0
        %383 = vdwg.mxu0
        %s384 = smul.u32 %s27, 128
        %v385 = vlaneseq
        %v386 = vand.u32 %v385, 127
        %v387 = vstv %s384
        %v388 = vadd.s32 %v386, %v387
        %v389 = vld [vmem:[%s279] sm:$0xff]
        %v390 = vld [vmem:[%s279 + $0x8] sm:$0xff]
        %391 = vset.pattern.permute.xlu0 0
        %392 = vperm.xlu0 %391, %v389
        %v393 = vpop.permute.xlu0 %392
        %394 = vset.pattern.permute.xlu0 0
        %395 = vperm.xlu0 %394, %v390
        %v396 = vpop.permute.xlu0 %395
        %vm397 = vcmp.eq.s32.totalorder %v388, %v393
        %vm398 = vcmp.eq.s32.totalorder %v388, %v396
        %vm399 = vcmp.ge.s32.totalorder %v389, %v387
        %vm400 = vcmp.ge.s32.totalorder %v390, %v387
        %s401 = sadd.s32 %s384, 128
        %v402 = vstv %s401
        %vm403 = vcmp.lt.s32.totalorder %v389, %v402
        %vm404 = vcmp.lt.s32.totalorder %v390, %v402
        %vm405 = vmand %vm399, %vm403
        %vm406 = vmand %vm400, %vm404
        %v407 = vsel %vm397, %v378, 0.0
        %v408 = vsel %vm398, %v381, 0.0
        %409 = vadd.xlane.f32.xlu0 %v407
        %v410 = vpop.xlane.xlu0 %409
        %411 = vadd.xlane.f32.xlu0 %v408
        %v412 = vpop.xlane.xlu0 %411
        %v413 = vmul.f32 %v410, %v410
        %v414 = vmul.f32 %v412, %v412
        %v415 = vsub.f32 1.0, %v413
        %v416 = vsub.f32 1.0, %v414
        %v417 = vmax.f32 %v415, 0.0
        %v418 = vmax.f32 %v416, 0.0
        %v419 = vrsqrt.pop %v417
        %v420 = vmul.f32 %v417, %v419
        %vm421 = vcmp.eq.f32.partialorder %v417, inf
        %v422 = vsel %vm421, %v417, %v420
        %vm423 = vcmp.eq.f32.partialorder %v417, 0.0
        %v424 = vand.u32 %v417, 2147483648
        %v425 = vsel %vm423, %v424, %v422
        %v426 = vrsqrt.pop %v418
        %v427 = vmul.f32 %v418, %v426
        %vm428 = vcmp.eq.f32.partialorder %v418, inf
        %v429 = vsel %vm428, %v418, %v427
        %vm430 = vcmp.eq.f32.partialorder %v418, 0.0
        %v431 = vand.u32 %v418, 2147483648
        %v432 = vsel %vm430, %v431, %v429
        %v433 = vmul.f32 %v410, 0.87758255
        %v434 = vmul.f32 %v412, 0.87758255
        %v435 = vmul.f32 %v425, 0.47942555
        %v436 = vmul.f32 %v432, 0.47942555
        %v437 = vsub.f32 %v433, %v435
        %v438 = vsub.f32 %v434, %v436
        %vm439 = vcmp.gt.f32.partialorder %v410, -0.87758255
        %vm440 = vcmp.gt.f32.partialorder %v412, -0.87758255
        %v441 = vsub.f32 %v410, 0.23971277
        %v442 = vsub.f32 %v412, 0.23971277
        %v443 = vsel %vm439, %v437, %v441
        %v444 = vsel %vm440, %v438, %v442
        %v445 = vsel %vm397, %v443, %v378
        %v446 = vsel %vm398, %v444, %v381
        %v447 = vmul.f32 %v445, 30.0
        %v448 = vmul.f32 %v446, 30.0
        %449 = vst [vmem:[%s261] sm:$0xff] %v447
        %450 = vst [vmem:[%s261 + $0x8] sm:$0xff] %v448
        %v451 = vld [vmem:[#allocation2] sm:$0xff]
        %v452 = vld [vmem:[#allocation2 + $0x8] sm:$0xff]
        %453 = vmax.xlane.f32.xlu0 %v447
        %v454 = vpop.xlane.xlu0 %453
        %455 = vmax.xlane.f32.xlu0 %v448
        %v456 = vpop.xlane.xlu0 %455
        %v457 = vmax.f32 %v451, %v454
        %v458 = vmax.f32 %v452, %v456
        %v459 = vsub.f32 %v451, %v457
        %v460 = vsub.f32 %v452, %v458
        %v461 = vmul.f32 %v459, 1.442695
        %v462 = vpow.pop %v461
        %v463 = vmul.f32 %v460, 1.442695
        %v464 = vpow.pop %v463
        %v465 = vld [vmem:[#allocation3] sm:$0xff]
        %v466 = vld [vmem:[#allocation3 + $0x8] sm:$0xff]
        %v467 = vmul.f32 %v462, %v465
        %v468 = vmul.f32 %v464, %v466
        %470 = vset.pattern.permute.xlu0 0
        %471 = vperm.xlu0 %470, %v457
        %v472 = vpop.permute.xlu0 %471
        %475 = vset.pattern.permute.xlu0 0
        %476 = vperm.xlu0 %475, %v458
        %v477 = vpop.permute.xlu0 %476
        %v479 = vsub.f32 %v447, %v472
        %v480 = vsub.f32 %v448, %v477
        %v481 = vmul.f32 %v479, 1.442695
        %v482 = vpow.pop %v481
        %v483 = vmul.f32 %v480, 1.442695
        %v484 = vpow.pop %v483
        %485 = vadd.xlane.f32.xlu0 %v482
        %v486 = vpop.xlane.xlu0 %485
        %487 = vadd.xlane.f32.xlu0 %v484
        %v488 = vpop.xlane.xlu0 %487
        %v489 = vadd.f32 %v467, %v486
        %v490 = vadd.f32 %v468, %v488
        %vm491 = vcmask 7168
        %492 = vst.msk [vmem:[#allocation3] sm:$0xff] %vm491, %v489
        %493 = vst.msk [vmem:[#allocation3 + $0x8] sm:$0xff] %vm491, %v490
        %494 = vst.msk [vmem:[#allocation2] sm:$0xff] %vm491, %v457
        %495 = vst.msk [vmem:[#allocation2 + $0x8] sm:$0xff] %vm491, %v458
        %v496 = vld [vmem:[#allocation4] sm:$0xff]
        %v497 = vld [vmem:[#allocation4 + $0x8] sm:$0xff]
        %v498 = vmul.f32 %v443, 30.0
        %v499 = vmul.f32 %v444, 30.0
        %v500 = vsel %vm405, %v498, 0.0
        %v501 = vsel %vm406, %v499, 0.0
        %v502 = vadd.f32 %v496, %v500
        %v503 = vadd.f32 %v497, %v501
        %504 = vst.msk [vmem:[#allocation4] sm:$0xff] %vm491, %v502
        %505 = vst.msk [vmem:[#allocation4 + $0x8] sm:$0xff] %vm491, %v503
        %p506 = scmp.eq.s32.totalorder %s27, 1
        // Predicated region
        $region41: #{tpu_custom_call.1} parent=31 // pred_check
          %p507 = pneg %p506
        $region42: #{tpu_custom_call.1} parent=31 // pred_check_branch
          %509 = sbr.rel (%p507) target = $region44
        $region43: #{tpu_custom_call.1} parent=31 // pred_region
          %v510 = vld [vmem:[#allocation2] sm:$0xff]
          %v511 = vld [vmem:[#allocation2 + $0x8] sm:$0xff]
          %v512 = vld [vmem:[#allocation3] sm:$0xff]
          %v513 = vld [vmem:[#allocation3 + $0x8] sm:$0xff]
          %v514 = vlog2.pop %v512
          %v515 = vmul.f32 %v514, 0.6931472
          %v516 = vlog2.pop %v513
          %v517 = vmul.f32 %v516, 0.6931472
          %v518 = vadd.f32 %v510, %v515
          %v519 = vadd.f32 %v511, %v517
          %v520 = vld [vmem:[#allocation4] sm:$0xff]
          %v521 = vld [vmem:[#allocation4 + $0x8] sm:$0xff]
          %v522 = vsub.f32 %v518, %v520
          %v523 = vsub.f32 %v519, %v521
          %524 = vst.msk [vmem:[%s286] sm:$0xff] %vm491, %v522
          %525 = vst.msk [vmem:[%s286 + $0x8] sm:$0xff] %vm491, %v523
        $region44: #{tpu_custom_call.1} parent=31 // pred_fallthru
          _
        %s526 = sand.u32 %s122, 1
        %s527 = scalar_lea.sflag [#allocation7], %s526
        %s528 = sand.u32 %s122, 1
        %s529 = smul.addr %s528, 16
        %s530 = scalar_lea.vmem [#allocation8], %s529
        %s531 = smul.u32 2, %s26
        %p532 = scmp.lt.s32.totalorder %s531, 3
        %s533 = scalar_select %p532, %s531, 3
        %s534 = smul.addr %s533, 8
        %s535 = scalar_lea.vmem %s4, %s534
        // Predicated region
        $region45: #{tpu_custom_call.1} parent=31 // pred_check
          %p536 = pneg %p132
        $region46: #{tpu_custom_call.1} parent=31 // pred_check_branch
          %538 = sbr.rel (%p536) target = $region48
        $region47: #{tpu_custom_call.1} parent=31 // pred_region
          %s539 = smul.u32 2, %s26
          %s541 = ssub.s32 256, 256
          %542 = vsyncadd %s527, %s541
          %s543 = smul.addr %s539, 2
          %s544 = sadd.s32 %s27, %s543
          %s545 = smul.addr %s544, 128
          %s546 = scalar_lea.hbm %s3, %s545
          %s547 = sshll.u32 %s530, 4
          %s548 = int_to_ptr.vmem [resolvable:$true] %s547
          %553 = dma.vmem_to_hbm [thread:$0]  %s548, 256, %s546, %s527, 128, 256, 8
        $region48: #{tpu_custom_call.1} parent=31 // pred_fallthru
          _
        // Predicated region
        $region49: #{tpu_custom_call.1} parent=31 // pred_check
          %p554 = pneg %p158
        $region50: #{tpu_custom_call.1} parent=31 // pred_check_branch
          %556 = sbr.rel (%p554) target = $region52
        $region51: #{tpu_custom_call.1} parent=31 // pred_region
          %s557 = smul.u32 2, %s26
        $region52: #{tpu_custom_call.1} parent=31 // pred_fallthru
          _
      $region32: #{tpu_custom_call.1} parent=5 // pred_fallthru
        _
      %p558 = scmp.le.s32.totalorder 2, %s17
      // Predicated region
      $region53: #{tpu_custom_call.1} parent=5 // pred_check
        %p559 = pneg %p558
      $region54: #{tpu_custom_call.1} parent=5 // pred_check_branch
        %561 = sbr.rel (%p559) target = $region56
      $region55: #{tpu_custom_call.1} parent=5 // pred_region
        %s562 = ssub.s32 %s17, 2
        // Predicated region
        $region57: #{tpu_custom_call.1} parent=55 // pred_check
          %p563 = pneg %p138
        $region58: #{tpu_custom_call.1} parent=55 // pred_check_branch
          %565 = sbr.rel (%p563) target = $region60
        $region59: #{tpu_custom_call.1} parent=55 // pred_region
          %s566 = sand.u32 %s123, 1
          %s567 = scalar_lea.sflag [#allocation7], %s566
          %s568 = sand.u32 %s123, 1
          %s569 = smul.addr %s568, 16
          %s570 = scalar_lea.vmem [#allocation8], %s569
          %571 = dma.done %s567, 256
        $region60: #{tpu_custom_call.1} parent=55 // pred_fallthru
          _
        // Predicated region
        $region61: #{tpu_custom_call.1} parent=55 // pred_check
          %p572 = pneg %p164
        $region62: #{tpu_custom_call.1} parent=55 // pred_check_branch
          %574 = sbr.rel (%p572) target = $region64
        $region63: #{tpu_custom_call.1} parent=55 // pred_region
          %s575 = smul.u32 2, %s28
          %p576 = scmp.lt.s32.totalorder %s575, 3
          %s577 = scalar_select %p576, %s575, 3
          %s578 = smul.addr %s577, 8
          %s579 = scalar_lea.vmem %s4, %s578
        $region64: #{tpu_custom_call.1} parent=55 // pred_fallthru
          _
      $region56: #{tpu_custom_call.1} parent=5 // pred_fallthru
        _
    $region6: #{tpu_custom_call.1} parent=1 // loop_footer
      %s21 = sadd.s32 1, %s17
    $region7: #{tpu_custom_call.1} parent=1 // loop_footer_branch
      %16 = sbr.rel target = $region3
    $region8: #{tpu_custom_call.1} parent=1 // loop_exit
      _
    %580 = vsyncpa [#allocation6], 1
    %s581 = scalar_lea.sflag [#allocation6], 1
    %582 = vsyncpa %s581, 1
    %583 = vsyncpa [#allocation7], 1
    %s584 = scalar_lea.sflag [#allocation7], 1
    %585 = vsyncpa %s584, 1

</llo_original>
